<compile_context>
chip_gen: v6e
topology: v6e:2x2x1
jax: 0.10.0
libtpu: 0.0.40
codegen_flags: <defaults>
</compile_context>

<pallas_src>
import math

import jax
import jax.numpy as jnp
from jax.experimental import pallas as pl
from jax.experimental.pallas import tpu as pltpu


def sdpa_kernel(x_ref, mask_ref, o_ref):
    # x_ref: (S, D) f32 VMEM tile, reused as q, k and v.
    # mask_ref: (1, 1) f32 scalar in SMEM (attn_mask with hidden_dims=1).
    x = x_ref[...]                                   # (S, D) f32
    scale = 1.0 / math.sqrt(x.shape[-1])

    # Fold the softmax scale into q (one VPU mul on a small live operand).
    q = x * scale                                    # (S, D)

    # attn = (q * scale) @ k^T  -- single 2D MXU matmul.
    attn = jnp.dot(q, x.T, preferred_element_type=jnp.float32)   # (S, S)

    # attn = attn + attn_mask  (scalar broadcast; provably zero, kept for fidelity)
    attn = attn + mask_ref[0, 0]

    # dropout: eval-mode identity (see TODO above).

    # out = attn @ v  -- second 2D MXU matmul.
    o_ref[...] = jnp.dot(attn, x, preferred_element_type=jnp.float32)


def model_forward(x, attn_mask):
    """x: (B, S, D) float32 with B == 1; attn_mask: (1, h, h) with h == 1."""
    B, S, D = x.shape
    assert B == 1, "module spec fixes batch = 1; squeeze batch for 2D MXU dots"
    assert attn_mask.size == 1, "module spec fixes hidden_dims = 1 (scalar mask)"

    x2d = x.reshape(S, D)                    # squeeze batch in the wrapper
    mask_scalar = attn_mask.reshape(1, 1).astype(jnp.float32)

    out2d = pl.pallas_call(
        sdpa_kernel,
        out_shape=jax.ShapeDtypeStruct((S, D), x.dtype),
        in_specs=[
            pl.BlockSpec((S, D), lambda: (0, 0)),                       # x (q=k=v)
            pl.BlockSpec(memory_space=pltpu.MemorySpace.SMEM),          # scalar mask
        ],
        out_specs=pl.BlockSpec((S, D), lambda: (0, 0)),
    )(x2d, mask_scalar)

    return out2d.reshape(B, S, D)


def make_attn_mask(key, hidden_dims):
    # torch.tril(torch.randn(1, h, h)).triu(diagonal=1) -> identically zero,
    # constructed the same way for fidelity.
    m = jax.random.normal(key, (1, hidden_dims, hidden_dims), dtype=jnp.float32)
    m = jnp.tril(m)           # keep lower triangle (incl. diag)
    m = jnp.triu(m, k=1)      # keep strictly upper triangle -> zeros
    return m


if __name__ == "__main__":
    hidden_dims = 1

    key = jax.random.PRNGKey(0)
    k_mask, k_in = jax.random.split(key)

    attn_mask = make_attn_mask(k_mask, hidden_dims)              # (1, 1, 1)
    x = jax.random.normal(k_in, (1, 16, 16), dtype=jnp.float32)  # torch.randn(1,16,16)

    out = model_forward(x, attn_mask)
    out = jax.block_until_ready(out)

    # sanity check vs. plain-JAX reference of the torch forward
    scale = 1.0 / math.sqrt(x.shape[-1])
    ref_attn = jnp.einsum("bqd,bkd->bqk", x, x) * scale + attn_mask
    ref = jnp.einsum("bqk,bkd->bqd", ref_attn, x)
    assert jnp.allclose(out, ref, atol=1e-5, rtol=1e-5)

    print("KERNEL_OK")
</pallas_src>

<mosaic_0001>
module attributes {stable_mosaic.version = 11 : i64} {
  func.func @sdpa_kernel(%arg0: memref<16x16xf32, #tpu.memory_space<vmem>>, %arg1: memref<1x1xf32, #tpu.memory_space<smem>>, %arg2: memref<16x16xf32, #tpu.memory_space<vmem>>) attributes {dimension_semantics = [], scalar_prefetch = 0 : i64, scratch_operands = 0 : i64, tpu.core_type = #tpu.core_type<tc>} {
    %c0 = arith.constant 0 : index
    %c0_0 = arith.constant 0 : index
    %0 = vector.load %arg0[%c0, %c0_0] : memref<16x16xf32, #tpu.memory_space<vmem>>, vector<16x16xf32>
    %cst = arith.constant 2.500000e-01 : f32
    %1 = vector.broadcast %cst : f32 to vector<16x16xf32>
    %2 = arith.mulf %0, %1 : vector<16x16xf32>
    %3 = tpu.transpose %0, [1, 0] : vector<16x16xf32> -> vector<16x16xf32>
    %cst_1 = arith.constant dense<0.000000e+00> : vector<16x16xf32>
    %4 = tpu.matmul %2, %3, %cst_1 {dimension_numbers = #tpu.dot_dimension_numbers<[1], [0], [0], [1], [0, 0, 1, 1], [], []>} : vector<16x16xf32>, vector<16x16xf32>, vector<16x16xf32> -> vector<16x16xf32>
    %c0_2 = arith.constant 0 : index
    %c0_3 = arith.constant 0 : index
    %5 = memref.load %arg1[%c0_2, %c0_3] : memref<1x1xf32, #tpu.memory_space<smem>>
    %6 = vector.broadcast %5 : f32 to vector<16x16xf32>
    %7 = arith.addf %4, %6 : vector<16x16xf32>
    %cst_4 = arith.constant dense<0.000000e+00> : vector<16x16xf32>
    %8 = tpu.matmul %7, %0, %cst_4 {dimension_numbers = #tpu.dot_dimension_numbers<[1], [0], [0], [1], [0, 0, 1, 1], [], []>} : vector<16x16xf32>, vector<16x16xf32>, vector<16x16xf32> -> vector<16x16xf32>
    %c0_5 = arith.constant 0 : index
    %c0_6 = arith.constant 0 : index
    %9 = vector.load %arg2[%c0_5, %c0_6] : memref<16x16xf32, #tpu.memory_space<vmem>>, vector<16x16xf32>
    tpu.vector_store %arg2[%c0_5, %c0_6], %8 {strides = array<i32>} : memref<16x16xf32, #tpu.memory_space<vmem>>, vector<16x16xf32>,
    return
  }
}

</mosaic_0001>

<llo_original>
// kernel: tpu_custom_call.1
$region0: #{tpu_custom_call.1}
  #allocation0 [shape = 'u32[]', space=smem, size = 0x4, offset = 0x4, fixed_abs, tag = 'smem constant byte address 0x4 - core index']
  #allocation1 [shape = 'u32[144,128]{1,0:T(1,128)}', space=vmem, size = 0x12000, scoped, tag = 'internal scratch']
  #allocation2 [shape = 'f32[1,1]{1,0:T(1,128)S(6)}', space=smem, size = 0x200, scoped, tag = 'scoped memory for tpu_custom_call.1']
  %s0 = inlined_call_operand.hbm [shape: f32[16,16], index: 0, kind: input, shape index: {}]
  %s1 = inlined_call_operand.<no memory space> [shape: f32[1,1], index: 1, kind: input, shape index: {}]
  %s2 = inlined_call_operand.hbm [shape: f32[16,16], index: 2, kind: output, shape index: {}]
  %s3 = sld [smem:[#allocation0]]
  $region22: #{tpu_custom_call.1} parent=0
    _
  %s5 = ssub.s32 1, %s3
  %s6 = scalar_select 0, %s5, %s3
  %7 = sst [smem:[#allocation2]] %s1
  $region1: #{tpu_custom_call.1} parent=0
    #allocation3 [shape = 'u8[8192]{0}', space=vmem, size = 0x2000, scoped, tag = 'input window, operand 0, single buffered']
    #allocation4 [shape = 's32[1]{0}', space=sflag, size = 0x4, scoped, tag = 'scoped memory for tpu_custom_call.1']
    #allocation5 [shape = 's32[1]{0}', space=sflag, size = 0x4, scoped, tag = 'scoped memory for tpu_custom_call.1']
    #allocation6 [shape = 'u8[8192]{0}', space=vmem, size = 0x2000, scoped, tag = 'output window, operand 0, single buffered']
    %8 = vsyncpa [#allocation4], 0
    %9 = vsyncpa [#allocation5], 0
    // Predicated region
    $region2: #{tpu_custom_call.1} parent=1 // pred_check
      _
    $region3: #{tpu_custom_call.1} parent=1 // pred_check_branch
      %11 = sbr.rel (0) target = $region5
    $region4: #{tpu_custom_call.1} parent=1 // pred_region
      %s13 = ssub.s32 256, 256
      %14 = vsyncadd [#allocation4], %s13
      %s15 = sshll.u32 [#allocation3], 4
      %s16 = int_to_ptr.vmem [resolvable:$true] %s15
      %21 = dma.hbm_to_vmem [thread:$0]  %s0, 256, %s16, [#allocation4], 128, 128, 8
    $region5: #{tpu_custom_call.1} parent=1 // pred_fallthru
      _
    // Predicated region
    $region6: #{tpu_custom_call.1} parent=1 // pred_check
      _
    $region7: #{tpu_custom_call.1} parent=1 // pred_check_branch
      %23 = sbr.rel (0) target = $region9
    $region8: #{tpu_custom_call.1} parent=1 // pred_region
      _
    $region9: #{tpu_custom_call.1} parent=1 // pred_fallthru
      _
    // Predicated region
    $region10: #{tpu_custom_call.1} parent=1 // pred_check
      _
    $region11: #{tpu_custom_call.1} parent=1 // pred_check_branch
      %25 = sbr.rel (0) target = $region13
    $region12: #{tpu_custom_call.1} parent=1 // pred_region
      %26 = dma.done [#allocation4], 256
    $region13: #{tpu_custom_call.1} parent=1 // pred_fallthru
      _
    %v27 = vld [vmem:[#allocation3] sm:$0xff]
    %v28 = vld [vmem:[#allocation3 + $0x8] sm:$0xff]
    %v29 = vmul.f32 %v27, 0.25
    %v30 = vmul.f32 %v28, 0.25
    %s31 = sld [smem:[#allocation2]]
    %v32 = vstv %s31
    %vm33 = vcmask 130048
    %v35 = vsel %vm33, %v29, 0
    %v38 = vsel %vm33, %v30, 0
    %v41 = vsel %vm33, %v27, 0
    %v44 = vsel %vm33, %v28, 0
    %46 = vmatprep.subr.mxu0 0.0
    %47 = vmatpush1.xpose.msra.mxu0 0.0
    %48 = vmatprep.subr.mxu0 0.0
    %49 = vmatpush1.xpose.msra.mxu0 0.0
    %50 = vmatprep.subr.mxu0 0.0
    %51 = vmatpush1.xpose.msra.mxu0 0.0
    %52 = vmatprep.subr.mxu0 0.0
    %53 = vmatpush1.xpose.msra.mxu0 0.0
    %54 = vmatprep.subr.mxu0 0.0
    %55 = vmatpush1.xpose.msra.mxu0 0.0
    %56 = vmatprep.subr.mxu0 0.0
    %57 = vmatpush1.xpose.msra.mxu0 0.0
    %58 = vmatprep.subr.mxu0 0.0
    %59 = vmatpush1.xpose.msra.mxu0 0.0
    %60 = vmatprep.subr.mxu0 0.0
    %61 = vmatpush1.xpose.msra.mxu0 0.0
    %62 = vmatprep.subr.mxu0 0.0
    %63 = vmatpush1.xpose.msra.mxu0 0.0
    %64 = vmatprep.subr.mxu0 0.0
    %65 = vmatpush1.xpose.msra.mxu0 0.0
    %66 = vmatprep.subr.mxu0 0.0
    %67 = vmatpush1.xpose.msra.mxu0 0.0
    %68 = vmatprep.subr.mxu0 0.0
    %69 = vmatpush1.xpose.msra.mxu0 0.0
    %70 = vmatprep.subr.mxu0 0.0
    %71 = vmatpush1.xpose.msra.mxu0 0.0
    %72 = vmatprep.subr.mxu0 0.0
    %73 = vmatpush1.xpose.msra.mxu0 0.0
    %74 = vmatprep.subr.mxu0 0.0
    %75 = vmatpush1.xpose.msra.mxu0 %v44
    %76 = vmatprep.subr.mxu0 0.0
    %77 = vmatpush1.xpose.msra.mxu0 %v41
    %78 = vmatprep.subr.mxu0 0.0
    %79 = vmatpush2.xpose.msra.mxu0 0.0
    %80 = vmatprep.subr.mxu0 0.0
    %81 = vmatpush2.xpose.msra.mxu0 0.0
    %82 = vmatprep.subr.mxu0 0.0
    %83 = vmatpush2.xpose.msra.mxu0 0.0
    %84 = vmatprep.subr.mxu0 0.0
    %85 = vmatpush2.xpose.msra.mxu0 0.0
    %86 = vmatprep.subr.mxu0 0.0
    %87 = vmatpush2.xpose.msra.mxu0 0.0
    %88 = vmatprep.subr.mxu0 0.0
    %89 = vmatpush2.xpose.msra.mxu0 0.0
    %90 = vmatprep.subr.mxu0 0.0
    %91 = vmatpush2.xpose.msra.mxu0 0.0
    %92 = vmatprep.subr.mxu0 0.0
    %93 = vmatpush2.xpose.msra.mxu0 0.0
    %94 = vmatprep.subr.mxu0 0.0
    %95 = vmatpush2.xpose.msra.mxu0 0.0
    %96 = vmatprep.subr.mxu0 0.0
    %97 = vmatpush2.xpose.msra.mxu0 0.0
    %98 = vmatprep.subr.mxu0 0.0
    %99 = vmatpush2.xpose.msra.mxu0 0.0
    %100 = vmatprep.subr.mxu0 0.0
    %101 = vmatpush2.xpose.msra.mxu0 0.0
    %102 = vmatprep.subr.mxu0 0.0
    %103 = vmatpush2.xpose.msra.mxu0 0.0
    %104 = vmatprep.subr.mxu0 0.0
    %105 = vmatpush2.xpose.msra.mxu0 0.0
    %106 = vmatprep.subr.mxu0 0.0
    %107 = vmatpush2.xpose.msra.mxu0 0.0
    %108 = vmatprep.subr.mxu0 0.0
    %109 = vmatpush2.xpose.msra.mxu0 0.0
    %110 = vmatprep.mubr.f32.mxu0 0.0
    %111 = vmatmul.mubr.f32.gmra.mxu0 %v35
    %v112 = vpop.f32.mrf.mxu0
    %v113 = vadd.f32 %v32, %v112
    %v114 = vpop.f32.mrf.mxu0
    %115 = vmatprep.mubr.f32.mxu0 0.0
    %116 = vmatmul.mubr.f32.gmra.mxu0 %v38
    %v117 = vpop.f32.mrf.mxu0
    %v118 = vadd.f32 %v32, %v117
    %v119 = vpop.f32.mrf.mxu0
    %120 = vdwg.mxu0
    %v122 = vsel %vm33, %v113, 0
    %v125 = vsel %vm33, %v118, 0
    %127 = vmatprep.subr.mxu0 0.0
    %128 = vmatpush1.msra.mxu0 0.0
    %129 = vmatprep.subr.mxu0 0.0
    %130 = vmatpush1.msra.mxu0 0.0
    %131 = vmatprep.subr.mxu0 0.0
    %132 = vmatpush1.msra.mxu0 0.0
    %133 = vmatprep.subr.mxu0 0.0
    %134 = vmatpush1.msra.mxu0 0.0
    %135 = vmatprep.subr.mxu0 0.0
    %136 = vmatpush1.msra.mxu0 0.0
    %137 = vmatprep.subr.mxu0 0.0
    %138 = vmatpush1.msra.mxu0 0.0
    %139 = vmatprep.subr.mxu0 0.0
    %140 = vmatpush1.msra.mxu0 0.0
    %141 = vmatprep.subr.mxu0 0.0
    %142 = vmatpush1.msra.mxu0 0.0
    %143 = vmatprep.subr.mxu0 0.0
    %144 = vmatpush1.msra.mxu0 0.0
    %145 = vmatprep.subr.mxu0 0.0
    %146 = vmatpush1.msra.mxu0 0.0
    %147 = vmatprep.subr.mxu0 0.0
    %148 = vmatpush1.msra.mxu0 0.0
    %149 = vmatprep.subr.mxu0 0.0
    %150 = vmatpush1.msra.mxu0 0.0
    %151 = vmatprep.subr.mxu0 0.0
    %152 = vmatpush1.msra.mxu0 0.0
    %153 = vmatprep.subr.mxu0 0.0
    %154 = vmatpush1.msra.mxu0 0.0
    %155 = vmatprep.subr.mxu0 0.0
    %156 = vmatpush1.msra.mxu0 %v28
    %157 = vmatprep.subr.mxu0 0.0
    %158 = vmatpush1.msra.mxu0 %v27
    %159 = vmatprep.subr.mxu0 0.0
    %160 = vmatpush2.msra.mxu0 0.0
    %161 = vmatprep.subr.mxu0 0.0
    %162 = vmatpush2.msra.mxu0 0.0
    %163 = vmatprep.subr.mxu0 0.0
    %164 = vmatpush2.msra.mxu0 0.0
    %165 = vmatprep.subr.mxu0 0.0
    %166 = vmatpush2.msra.mxu0 0.0
    %167 = vmatprep.subr.mxu0 0.0
    %168 = vmatpush2.msra.mxu0 0.0
    %169 = vmatprep.subr.mxu0 0.0
    %170 = vmatpush2.msra.mxu0 0.0
    %171 = vmatprep.subr.mxu0 0.0
    %172 = vmatpush2.msra.mxu0 0.0
    %173 = vmatprep.subr.mxu0 0.0
    %174 = vmatpush2.msra.mxu0 0.0
    %175 = vmatprep.subr.mxu0 0.0
    %176 = vmatpush2.msra.mxu0 0.0
    %177 = vmatprep.subr.mxu0 0.0
    %178 = vmatpush2.msra.mxu0 0.0
    %179 = vmatprep.subr.mxu0 0.0
    %180 = vmatpush2.msra.mxu0 0.0
    %181 = vmatprep.subr.mxu0 0.0
    %182 = vmatpush2.msra.mxu0 0.0
    %183 = vmatprep.subr.mxu0 0.0
    %184 = vmatpush2.msra.mxu0 0.0
    %185 = vmatprep.subr.mxu0 0.0
    %186 = vmatpush2.msra.mxu0 0.0
    %187 = vmatprep.subr.mxu0 0.0
    %188 = vmatpush2.msra.mxu0 0.0
    %189 = vmatprep.subr.mxu0 0.0
    %190 = vmatpush2.msra.mxu0 0.0
    %191 = vmatprep.mubr.f32.mxu0 0.0
    %192 = vmatmul.mubr.f32.gmra.mxu0 %v122
    %v193 = vpop.f32.mrf.mxu0
    %v194 = vadd.f32 0.0, %v193
    %v195 = vpop.f32.mrf.mxu0
    %196 = vmatprep.mubr.f32.mxu0 0.0
    %197 = vmatmul.mubr.f32.gmra.mxu0 %v125
    %v198 = vpop.f32.mrf.mxu0
    %v199 = vadd.f32 0.0, %v198
    %v200 = vpop.f32.mrf.mxu0
    %201 = vdwg.mxu0
    %202 = vst.msk [vmem:[#allocation6] sm:$0xff] %vm33, %v194
    %203 = vst.msk [vmem:[#allocation6 + $0x8] sm:$0xff] %vm33, %v199
    // Predicated region
    $region14: #{tpu_custom_call.1} parent=1 // pred_check
      _
    $region15: #{tpu_custom_call.1} parent=1 // pred_check_branch
      %205 = sbr.rel (0) target = $region17
    $region16: #{tpu_custom_call.1} parent=1 // pred_region
      %s207 = ssub.s32 256, 256
      %208 = vsyncadd [#allocation5], %s207
      %s209 = sshll.u32 [#allocation6], 4
      %s210 = int_to_ptr.vmem [resolvable:$true] %s209
      %215 = dma.vmem_to_hbm [thread:$0]  %s210, 256, %s2, [#allocation5], 128, 128, 8
    $region17: #{tpu_custom_call.1} parent=1 // pred_fallthru
      _
    // Predicated region
    $region18: #{tpu_custom_call.1} parent=1 // pred_check
      _
    $region19: #{tpu_custom_call.1} parent=1 // pred_check_branch
      %217 = sbr.rel (0) target = $region21
    $region20: #{tpu_custom_call.1} parent=1 // pred_region
      %218 = dma.done [#allocation5], 256
    $region21: #{tpu_custom_call.1} parent=1 // pred_fallthru
      _
    %219 = vsyncpa [#allocation4], 1
    %220 = vsyncpa [#allocation5], 1

</llo_original>
